<compile_context>
chip_gen: v5e
topology: v5e:2x2
jax: 0.10.0
libtpu: 0.0.40
codegen_flags: <defaults>
</compile_context>

<pallas_src>
import math
import jax
import jax.numpy as jnp
from jax.experimental import pallas as pl
from jax.experimental.pallas import tpu as pltpu


# ----------------------------------------------------------------------------- kernel

def _make_kernel(L, H, B, y_dim, in_pad, T):
    """T-step multi-layer LSTM recurrence + fused mu/presigma heads, one invocation.

    Kernel refs (all fully VMEM-resident, single invocation, no grid):
      xy_ref     [T, B, in_pad]        concat(x, y_prev) per step, zero-padded to in_pad
      h0_ref     [L, B, H]             initial hidden
      c0_ref     [L, B, H]             initial cell
      w_ref      [L, in_pad + H, 4H]   fused [w_ih^T | w_hh^T] per layer
      b_ref      [L, 1, 4H]            b_ih + b_hh per layer
      wh_ref     [L*H, 2*y_dim]        fused mu|presigma head weights
      bh_ref     [1, 2*y_dim]          fused mu|presigma head bias
    outputs:
      head_ref   [T, B, 2*y_dim]       per-step (mu | sigma); single HBM writeback
      h_out_ref  [L, B, H]             final hidden (carried in-place across steps)
      c_out_ref  [L, B, H]             final cell
    scratch:
      fused_ref  [B, in_pad + H]       persistent MXU operand [inp | h_prev]
      hcat_ref   [B, L*H]              lane-concatenated hidden states for the head dot
    """

    def kernel(xy_ref, h0_ref, c0_ref, w_ref, b_ref, wh_ref, bh_ref,
               head_ref, h_out_ref, c_out_ref, fused_ref, hcat_ref):
        # h/c live in the resident output blocks for the whole sequence.
        h_out_ref[...] = h0_ref[...]
        c_out_ref[...] = c0_ref[...]

        # Loop-invariant epilogue mask (mu columns = identity, sigma columns = softplus).
        col = jax.lax.broadcasted_iota(jnp.int32, (B, 2 * y_dim), 1)
        is_mu = col < y_dim

        def step(t, carry):
            # xy half of the fused operand (h half is (re)written per layer below).
            fused_ref[:, 0:in_pad] = xy_ref[t]                       # [B, in_pad]
            for l in range(L):
                h_prev = h_out_ref[l]                                # [B, H]
                c_prev = c_out_ref[l]                                # [B, H]
                fused_ref[:, in_pad:in_pad + H] = h_prev

                z = jnp.dot(fused_ref[...], w_ref[l],
                            preferred_element_type=jnp.float32) + b_ref[l]   # [B, 4H]

                # Gate order matches torch: (i, f, g, o).
                i_g = jax.nn.sigmoid(z[:, 0 * H:1 * H])
                f_g = jax.nn.sigmoid(z[:, 1 * H:2 * H])
                g_g = jnp.tanh(z[:, 2 * H:3 * H])
                o_g = jax.nn.sigmoid(z[:, 3 * H:4 * H])

                c_new = f_g * c_prev + i_g * g_g
                h_new = o_g * jnp.tanh(c_new)

                h_out_ref[l] = h_new
                c_out_ref[l] = c_new
                hcat_ref[:, l * H:(l + 1) * H] = h_new

                if l + 1 < L:
                    # Next layer's input.  Columns H..in_pad (if any) multiply
                    # zero weight rows, so stale data there is harmless.
                    fused_ref[:, 0:H] = h_new

            # Fused heads: one dot on the lane-concatenated hidden states.
            head = jnp.dot(hcat_ref[...], wh_ref[...],
                           preferred_element_type=jnp.float32) + bh_ref[...]  # [B, 2*y_dim]
            # Softplus(beta=1, threshold=20); the min() guard keeps exp finite.
            sp = jnp.where(head > 20.0, head,
                           jnp.log1p(jnp.exp(jnp.minimum(head, 20.0))))
            head_ref[t] = jnp.where(is_mu, head, sp)
            return carry

        jax.lax.fori_loop(0, T, step, 0, unroll=True)

    return kernel


# ----------------------------------------------------------------------------- glue

def pack_params(params, x_dim, y_dim, H, L):
    """Reorganize torch-layout params into the fused/stacked kernel layout (done once)."""
    din = x_dim + y_dim
    in_pad = max(din, H)

    w_layers, b_layers = [], []
    for l in range(L):
        w_ih_t = params[f"w_ih_{l}"].T                     # [in_l, 4H]
        in_l = w_ih_t.shape[0]
        if in_l < in_pad:                                  # zero-pad to common width
            w_ih_t = jnp.concatenate(
                [w_ih_t, jnp.zeros((in_pad - in_l, 4 * H), w_ih_t.dtype)], axis=0)
        w_hh_t = params[f"w_hh_{l}"].T                     # [H, 4H]
        w_layers.append(jnp.concatenate([w_ih_t, w_hh_t], axis=0))          # [in_pad+H, 4H]
        b_layers.append((params[f"b_ih_{l}"] + params[f"b_hh_{l}"])[None, :])  # [1, 4H]

    def reorg_head(W):   # torch [y_dim, H*L] acting on permute(1,2,0) -> [L*H, y_dim]
        return jnp.transpose(W.reshape(y_dim, H, L), (2, 1, 0)).reshape(L * H, y_dim)

    # TODO(synk): at scaled H/L, cast W_lstm/W_head to bf16 on v6e/v7x (keep f32
    # accumulation) to halve weight VMEM footprint; loosen test tolerances accordingly.
    return {
        "W_lstm": jnp.stack(w_layers).astype(jnp.float32),   # [L, in_pad+H, 4H]
        "b_lstm": jnp.stack(b_layers).astype(jnp.float32),   # [L, 1, 4H]
        "W_head": jnp.concatenate([reorg_head(params["w_mu"]),
                                   reorg_head(params["w_ps"])],
                                  axis=1).astype(jnp.float32),             # [L*H, 2*y_dim]
        "b_head": jnp.concatenate([params["b_mu"],
                                   params["b_ps"]])[None, :].astype(jnp.float32),  # [1, 2y]
        "in_pad": in_pad,
        "y_dim": y_dim,
    }


def lstm_sampler_forward_seq(x, y_prev, hidden, cell, packed):
    """Run T LSTMSampler.forward steps inside ONE pallas_call (teacher-forced y_prev).

    x: [T, B, x_dim], y_prev: [T, B, y_dim], hidden/cell: [L, B, H]
    Returns (mu [T,B,y_dim], sigma [T,B,y_dim], hidden [L,B,H], cell [L,B,H]).
    """
    T, B, _ = x.shape
    L, _, H = hidden.shape
    y_dim = packed["y_dim"]
    in_pad = packed["in_pad"]

    xy = jnp.concatenate([x, y_prev], axis=-1).astype(jnp.float32)   # [T, B, Din]
    din = xy.shape[-1]
    if din < in_pad:
        xy = jnp.concatenate(
            [xy, jnp.zeros((T, B, in_pad - din), jnp.float32)], axis=-1)

    out_shape = (
        jax.ShapeDtypeStruct((T, B, 2 * y_dim), jnp.float32),   # mu | sigma per step
        jax.ShapeDtypeStruct((L, B, H), jnp.float32),           # final hidden
        jax.ShapeDtypeStruct((L, B, H), jnp.float32),           # final cell
    )

    # Single invocation (no grid): every operand/result is one VMEM-resident block,
    # weights/state are DMA'd exactly once, and the recurrence pays zero per-step
    # pipeline overhead.  Total footprint at test shapes is ~70 KiB << VMEM on
    # v5e/v6e/v7x, so no vmem_limit_bytes override is needed.
    # TODO(synk): on v7x, independent sequences/batches could be split across the
    # two TensorCores with a leading "parallel" grid axis; a single sequence is serial.
    kernel = _make_kernel(L, H, B, y_dim, in_pad, T)
    head, h_out, c_out = pl.pallas_call(
        kernel,
        out_shape=out_shape,
        scratch_shapes=[
            pltpu.VMEM((B, in_pad + H), jnp.float32),   # fused [inp | h_prev] operand
            pltpu.VMEM((B, L * H), jnp.float32),        # concatenated hidden for the head
        ],
    )(xy, hidden.astype(jnp.float32), cell.astype(jnp.float32),
      packed["W_lstm"], packed["b_lstm"], packed["W_head"], packed["b_head"])

    mu = head[..., :y_dim]
    sigma = head[..., y_dim:]
    return mu, sigma, h_out, c_out


def lstm_sampler_forward(x, y_prev, hidden, cell, packed):
    """Single-step forward (matches LSTMSampler.forward signature, seq dim = 1)."""
    mu, sigma, h_out, c_out = lstm_sampler_forward_seq(x, y_prev, hidden, cell, packed)
    return mu[0], sigma[0], h_out, c_out


# ----------------------------------------------------------------------------- reference

def init_params(key, x_dim, y_dim, H, L):
    """Deterministic parameter init matching the module's shapes / forget-bias fill."""
    din = x_dim + y_dim
    k = 1.0 / math.sqrt(H)
    keys = jax.random.split(key, 4 * L + 4)
    idx = 0
    p = {}
    for l in range(L):
        in_sz = din if l == 0 else H
        p[f"w_ih_{l}"] = jax.random.uniform(keys[idx], (4 * H, in_sz),
                                            minval=-k, maxval=k); idx += 1
        p[f"w_hh_{l}"] = jax.random.uniform(keys[idx], (4 * H, H),
                                            minval=-k, maxval=k); idx += 1
        b_ih = jax.random.uniform(keys[idx], (4 * H,), minval=-k, maxval=k); idx += 1
        b_hh = jax.random.uniform(keys[idx], (4 * H,), minval=-k, maxval=k); idx += 1
        # forget-gate bias slice [H:2H] filled with 1.0 (as in LSTMSampler.__init__)
        p[f"b_ih_{l}"] = b_ih.at[H:2 * H].set(1.0)
        p[f"b_hh_{l}"] = b_hh.at[H:2 * H].set(1.0)
    kf = 1.0 / math.sqrt(H * L)
    p["w_mu"] = jax.random.uniform(keys[idx], (y_dim, H * L), minval=-kf, maxval=kf); idx += 1
    p["b_mu"] = jax.random.uniform(keys[idx], (y_dim,), minval=-kf, maxval=kf); idx += 1
    p["w_ps"] = jax.random.uniform(keys[idx], (y_dim, H * L), minval=-kf, maxval=kf); idx += 1
    p["b_ps"] = jax.random.uniform(keys[idx], (y_dim,), minval=-kf, maxval=kf); idx += 1
    return p


def reference_forward(x, y_prev, hidden, cell, p):
    """Pure-JAX single-step reference with exact PyTorch LSTM/Linear/Softplus semantics."""
    L, B, H = hidden.shape
    inp = jnp.concatenate([x, y_prev], axis=-1)[0]
    h_new, c_new = [], []
    for l in range(L):
        b = p[f"b_ih_{l}"] + p[f"b_hh_{l}"]
        z = inp @ p[f"w_ih_{l}"].T + hidden[l] @ p[f"w_hh_{l}"].T + b
        i = jax.nn.sigmoid(z[:, :H])
        f = jax.nn.sigmoid(z[:, H:2 * H])
        g = jnp.tanh(z[:, 2 * H:3 * H])
        o = jax.nn.sigmoid(z[:, 3 * H:])
        c = f * cell[l] + i * g
        h = o * jnp.tanh(c)
        h_new.append(h)
        c_new.append(c)
        inp = h
    hidden_out = jnp.stack(h_new)
    cell_out = jnp.stack(c_new)
    hp = jnp.transpose(hidden_out, (1, 2, 0)).reshape(B, -1)  # permute(1,2,0).view(B,-1)
    mu = hp @ p["w_mu"].T + p["b_mu"]
    ps = hp @ p["w_ps"].T + p["b_ps"]
    sigma = jax.nn.softplus(ps)
    return mu, sigma, hidden_out, cell_out


# ----------------------------------------------------------------------------- test

if __name__ == "__main__":
    x_dim, y_dim = 4, 4
    H, L, B = 32, 2, 2
    T = 8   # multi-step (teacher-forced) sequence handled in a single kernel launch

    key = jax.random.PRNGKey(0)
    kp, kx, ky, kh, kc = jax.random.split(key, 5)

    params = init_params(kp, x_dim, y_dim, H, L)
    packed = pack_params(params, x_dim, y_dim, H, L)

    x_seq = jax.random.normal(kx, (T, B, x_dim), dtype=jnp.float32)
    y_seq = jax.random.normal(ky, (T, B, y_dim), dtype=jnp.float32)
    hidden0 = jax.random.normal(kh, (L, B, H), dtype=jnp.float32)
    cell0 = jax.random.normal(kc, (L, B, H), dtype=jnp.float32)

    # --- single-step forward (exact module signature: seq dim = 1) ---
    mu, sigma, h_out, c_out = lstm_sampler_forward(
        x_seq[:1], y_seq[:1], hidden0, cell0, packed)
    jax.block_until_ready((mu, sigma, h_out, c_out))

    mu_r, sigma_r, h_r, c_r = reference_forward(x_seq[:1], y_seq[:1], hidden0, cell0, params)
    assert jnp.allclose(mu, mu_r, rtol=1e-4, atol=1e-4), "mu mismatch (1-step)"
    assert jnp.allclose(sigma, sigma_r, rtol=1e-4, atol=1e-4), "sigma mismatch (1-step)"
    assert jnp.allclose(h_out, h_r, rtol=1e-4, atol=1e-4), "hidden mismatch (1-step)"
    assert jnp.allclose(c_out, c_r, rtol=1e-4, atol=1e-4), "cell mismatch (1-step)"

    # --- T-step sequence in one launch vs. T reference forward() calls ---
    mu_s, sig_s, h_s, c_s = lstm_sampler_forward_seq(x_seq, y_seq, hidden0, cell0, packed)
    jax.block_until_ready((mu_s, sig_s, h_s, c_s))

    h_ref, c_ref = hidden0, cell0
    mu_ref_steps, sig_ref_steps = [], []
    for t in range(T):
        m_t, s_t, h_ref, c_ref = reference_forward(
            x_seq[t:t + 1], y_seq[t:t + 1], h_ref, c_ref, params)
        mu_ref_steps.append(m_t)
        sig_ref_steps.append(s_t)
    mu_ref_seq = jnp.stack(mu_ref_steps)
    sig_ref_seq = jnp.stack(sig_ref_steps)

    assert jnp.allclose(mu_s, mu_ref_seq, rtol=1e-4, atol=1e-4), "mu mismatch (seq)"
    assert jnp.allclose(sig_s, sig_ref_seq, rtol=1e-4, atol=1e-4), "sigma mismatch (seq)"
    assert jnp.allclose(h_s, h_ref, rtol=1e-4, atol=1e-4), "hidden mismatch (seq)"
    assert jnp.allclose(c_s, c_ref, rtol=1e-4, atol=1e-4), "cell mismatch (seq)"

    # TODO(synk): sample()'s autoregressive Gaussian draw loop (torch.distributions,
    # sampled y fed back as input) stays host-side; only forward()/teacher-forced
    # multi-step forward is implemented as a kernel.
    print("KERNEL_OK")
</pallas_src>

<mosaic_0001>
module attributes {stable_mosaic.version = 11 : i64} {
  func.func @kernel(%arg0: memref<1x2x32xf32, #tpu.memory_space<vmem>>, %arg1: memref<2x2x32xf32, #tpu.memory_space<vmem>>, %arg2: memref<2x2x32xf32, #tpu.memory_space<vmem>>, %arg3: memref<2x64x128xf32, #tpu.memory_space<vmem>>, %arg4: memref<2x1x128xf32, #tpu.memory_space<vmem>>, %arg5: memref<64x8xf32, #tpu.memory_space<vmem>>, %arg6: memref<1x8xf32, #tpu.memory_space<vmem>>, %arg7: memref<1x2x8xf32, #tpu.memory_space<vmem>>, %arg8: memref<2x2x32xf32, #tpu.memory_space<vmem>>, %arg9: memref<2x2x32xf32, #tpu.memory_space<vmem>>, %arg10: memref<2x64xf32, #tpu.memory_space<vmem>>, %arg11: memref<2x64xf32, #tpu.memory_space<vmem>>) attributes {dimension_semantics = [], scalar_prefetch = 0 : i64, scratch_operands = 2 : i64, tpu.core_type = #tpu.core_type<tc>} {
    %c0 = arith.constant 0 : index
    %c0_0 = arith.constant 0 : index
    %c0_1 = arith.constant 0 : index
    %0 = vector.load %arg1[%c0, %c0_0, %c0_1] : memref<2x2x32xf32, #tpu.memory_space<vmem>>, vector<2x2x32xf32>
    %c0_2 = arith.constant 0 : index
    %c0_3 = arith.constant 0 : index
    %c0_4 = arith.constant 0 : index
    %1 = vector.load %arg8[%c0_2, %c0_3, %c0_4] : memref<2x2x32xf32, #tpu.memory_space<vmem>>, vector<2x2x32xf32>
    tpu.vector_store %arg8[%c0_2, %c0_3, %c0_4], %0 {strides = array<i32>} : memref<2x2x32xf32, #tpu.memory_space<vmem>>, vector<2x2x32xf32>,
    %c0_5 = arith.constant 0 : index
    %c0_6 = arith.constant 0 : index
    %c0_7 = arith.constant 0 : index
    %2 = vector.load %arg2[%c0_5, %c0_6, %c0_7] : memref<2x2x32xf32, #tpu.memory_space<vmem>>, vector<2x2x32xf32>
    %c0_8 = arith.constant 0 : index
    %c0_9 = arith.constant 0 : index
    %c0_10 = arith.constant 0 : index
    %3 = vector.load %arg9[%c0_8, %c0_9, %c0_10] : memref<2x2x32xf32, #tpu.memory_space<vmem>>, vector<2x2x32xf32>
    tpu.vector_store %arg9[%c0_8, %c0_9, %c0_10], %2 {strides = array<i32>} : memref<2x2x32xf32, #tpu.memory_space<vmem>>, vector<2x2x32xf32>,
    %4 = tpu.iota {dimensions = array<i32: 1>} : vector<2x8xi32>
    %c4_i32 = arith.constant 4 : i32
    %5 = vector.broadcast %c4_i32 : i32 to vector<2x8xi32>
    %6 = arith.cmpi slt, %4, %5 : vector<2x8xi32>
    %c0_i32 = arith.constant 0 : i32
    %7 = arith.index_cast %c0_i32 : i32 to index
    %c0_11 = arith.constant 0 : index
    %c0_12 = arith.constant 0 : index
    %8 = vector.load %arg0[%7, %c0_11, %c0_12] : memref<1x2x32xf32, #tpu.memory_space<vmem>>, vector<1x2x32xf32>
    %9 = vector.shape_cast %8 : vector<1x2x32xf32> to vector<2x32xf32>
    %c0_13 = arith.constant 0 : index
    %c0_14 = arith.constant 0 : index
    %10 = vector.load %arg10[%c0_13, %c0_14] : memref<2x64xf32, #tpu.memory_space<vmem>>, vector<2x32xf32>
    tpu.vector_store %arg10[%c0_13, %c0_14], %9 {strides = array<i32>} : memref<2x64xf32, #tpu.memory_space<vmem>>, vector<2x32xf32>,
    %c0_15 = arith.constant 0 : index
    %c0_16 = arith.constant 0 : index
    %c0_17 = arith.constant 0 : index
    %11 = vector.load %arg8[%c0_15, %c0_16, %c0_17] : memref<2x2x32xf32, #tpu.memory_space<vmem>>, vector<1x2x32xf32>
    %12 = vector.shape_cast %11 : vector<1x2x32xf32> to vector<2x32xf32>
    %c0_18 = arith.constant 0 : index
    %c0_19 = arith.constant 0 : index
    %c0_20 = arith.constant 0 : index
    %13 = vector.load %arg9[%c0_18, %c0_19, %c0_20] : memref<2x2x32xf32, #tpu.memory_space<vmem>>, vector<1x2x32xf32>
    %14 = vector.shape_cast %13 : vector<1x2x32xf32> to vector<2x32xf32>
    %c0_21 = arith.constant 0 : index
    %c32 = arith.constant 32 : index
    %15 = vector.load %arg10[%c0_21, %c32] : memref<2x64xf32, #tpu.memory_space<vmem>>, vector<2x32xf32>
    tpu.vector_store %arg10[%c0_21, %c32], %12 {strides = array<i32>} : memref<2x64xf32, #tpu.memory_space<vmem>>, vector<2x32xf32>,
    %c0_22 = arith.constant 0 : index
    %c0_23 = arith.constant 0 : index
    %16 = vector.load %arg10[%c0_22, %c0_23] : memref<2x64xf32, #tpu.memory_space<vmem>>, vector<2x64xf32>
    %c0_24 = arith.constant 0 : index
    %c0_25 = arith.constant 0 : index
    %c0_26 = arith.constant 0 : index
    %17 = vector.load %arg3[%c0_24, %c0_25, %c0_26] : memref<2x64x128xf32, #tpu.memory_space<vmem>>, vector<1x64x128xf32>
    %18 = vector.shape_cast %17 : vector<1x64x128xf32> to vector<64x128xf32>
    %cst = arith.constant dense<0.000000e+00> : vector<2x128xf32>
    %19 = tpu.matmul %16, %18, %cst {dimension_numbers = #tpu.dot_dimension_numbers<[1], [0], [0], [1], [0, 0, 1, 1], [], []>} : vector<2x64xf32>, vector<64x128xf32>, vector<2x128xf32> -> vector<2x128xf32>
    %c0_27 = arith.constant 0 : index
    %c0_28 = arith.constant 0 : index
    %c0_29 = arith.constant 0 : index
    %20 = vector.load %arg4[%c0_27, %c0_28, %c0_29] : memref<2x1x128xf32, #tpu.memory_space<vmem>>, vector<1x1x128xf32>
    %21 = vector.shape_cast %20 : vector<1x1x128xf32> to vector<1x128xf32>
    %22 = vector.broadcast %21 : vector<1x128xf32> to vector<2x128xf32>
    %23 = arith.addf %19, %22 : vector<2x128xf32>
    %24 = vector.extract_strided_slice %23 {offsets = [0, 0], sizes = [2, 32], strides = [1, 1]} : vector<2x128xf32> to vector<2x32xf32>
    %25 = arith.negf %24 : vector<2x32xf32>
    %26 = math.exp %25 : vector<2x32xf32>
    %cst_30 = arith.constant 1.000000e+00 : f32
    %27 = vector.broadcast %cst_30 : f32 to vector<2x32xf32>
    %28 = arith.addf %27, %26 : vector<2x32xf32>
    %29 = arith.divf %27, %28 : vector<2x32xf32>
    %30 = vector.extract_strided_slice %23 {offsets = [0, 32], sizes = [2, 32], strides = [1, 1]} : vector<2x128xf32> to vector<2x32xf32>
    %31 = arith.negf %30 : vector<2x32xf32>
    %32 = math.exp %31 : vector<2x32xf32>
    %cst_31 = arith.constant 1.000000e+00 : f32
    %33 = vector.broadcast %cst_31 : f32 to vector<2x32xf32>
    %34 = arith.addf %33, %32 : vector<2x32xf32>
    %35 = arith.divf %33, %34 : vector<2x32xf32>
    %36 = vector.extract_strided_slice %23 {offsets = [0, 64], sizes = [2, 32], strides = [1, 1]} : vector<2x128xf32> to vector<2x32xf32>
    %37 = math.tanh %36 : vector<2x32xf32>
    %38 = vector.extract_strided_slice %23 {offsets = [0, 96], sizes = [2, 32], strides = [1, 1]} : vector<2x128xf32> to vector<2x32xf32>
    %39 = arith.negf %38 : vector<2x32xf32>
    %40 = math.exp %39 : vector<2x32xf32>
    %cst_32 = arith.constant 1.000000e+00 : f32
    %41 = vector.broadcast %cst_32 : f32 to vector<2x32xf32>
    %42 = arith.addf %41, %40 : vector<2x32xf32>
    %43 = arith.divf %41, %42 : vector<2x32xf32>
    %44 = arith.mulf %35, %14 : vector<2x32xf32>
    %45 = arith.mulf %29, %37 : vector<2x32xf32>
    %46 = arith.addf %44, %45 : vector<2x32xf32>
    %47 = math.tanh %46 : vector<2x32xf32>
    %48 = arith.mulf %43, %47 : vector<2x32xf32>
    %c0_33 = arith.constant 0 : index
    %c0_34 = arith.constant 0 : index
    %c0_35 = arith.constant 0 : index
    %49 = vector.load %arg8[%c0_33, %c0_34, %c0_35] : memref<2x2x32xf32, #tpu.memory_space<vmem>>, vector<1x2x32xf32>
    %50 = vector.shape_cast %49 : vector<1x2x32xf32> to vector<2x32xf32>
    %51 = vector.shape_cast %48 : vector<2x32xf32> to vector<1x2x32xf32>
    tpu.vector_store %arg8[%c0_33, %c0_34, %c0_35], %51 {strides = array<i32>} : memref<2x2x32xf32, #tpu.memory_space<vmem>>, vector<1x2x32xf32>,
    %c0_36 = arith.constant 0 : index
    %c0_37 = arith.constant 0 : index
    %c0_38 = arith.constant 0 : index
    %52 = vector.load %arg9[%c0_36, %c0_37, %c0_38] : memref<2x2x32xf32, #tpu.memory_space<vmem>>, vector<1x2x32xf32>
    %53 = vector.shape_cast %52 : vector<1x2x32xf32> to vector<2x32xf32>
    %54 = vector.shape_cast %46 : vector<2x32xf32> to vector<1x2x32xf32>
    tpu.vector_store %arg9[%c0_36, %c0_37, %c0_38], %54 {strides = array<i32>} : memref<2x2x32xf32, #tpu.memory_space<vmem>>, vector<1x2x32xf32>,
    %c0_39 = arith.constant 0 : index
    %c0_40 = arith.constant 0 : index
    %55 = vector.load %arg11[%c0_39, %c0_40] : memref<2x64xf32, #tpu.memory_space<vmem>>, vector<2x32xf32>
    tpu.vector_store %arg11[%c0_39, %c0_40], %48 {strides = array<i32>} : memref<2x64xf32, #tpu.memory_space<vmem>>, vector<2x32xf32>,
    %c0_41 = arith.constant 0 : index
    %c0_42 = arith.constant 0 : index
    %56 = vector.load %arg10[%c0_41, %c0_42] : memref<2x64xf32, #tpu.memory_space<vmem>>, vector<2x32xf32>
    tpu.vector_store %arg10[%c0_41, %c0_42], %48 {strides = array<i32>} : memref<2x64xf32, #tpu.memory_space<vmem>>, vector<2x32xf32>,
    %c1 = arith.constant 1 : index
    %c0_43 = arith.constant 0 : index
    %c0_44 = arith.constant 0 : index
    %57 = vector.load %arg8[%c1, %c0_43, %c0_44] : memref<2x2x32xf32, #tpu.memory_space<vmem>>, vector<1x2x32xf32>
    %58 = vector.shape_cast %57 : vector<1x2x32xf32> to vector<2x32xf32>
    %c1_45 = arith.constant 1 : index
    %c0_46 = arith.constant 0 : index
    %c0_47 = arith.constant 0 : index
    %59 = vector.load %arg9[%c1_45, %c0_46, %c0_47] : memref<2x2x32xf32, #tpu.memory_space<vmem>>, vector<1x2x32xf32>
    %60 = vector.shape_cast %59 : vector<1x2x32xf32> to vector<2x32xf32>
    %c0_48 = arith.constant 0 : index
    %c32_49 = arith.constant 32 : index
    %61 = vector.load %arg10[%c0_48, %c32_49] : memref<2x64xf32, #tpu.memory_space<vmem>>, vector<2x32xf32>
    tpu.vector_store %arg10[%c0_48, %c32_49], %58 {strides = array<i32>} : memref<2x64xf32, #tpu.memory_space<vmem>>, vector<2x32xf32>,
    %c0_50 = arith.constant 0 : index
    %c0_51 = arith.constant 0 : index
    %62 = vector.load %arg10[%c0_50, %c0_51] : memref<2x64xf32, #tpu.memory_space<vmem>>, vector<2x64xf32>
    %c1_52 = arith.constant 1 : index
    %c0_53 = arith.constant 0 : index
    %c0_54 = arith.constant 0 : index
    %63 = vector.load %arg3[%c1_52, %c0_53, %c0_54] : memref<2x64x128xf32, #tpu.memory_space<vmem>>, vector<1x64x128xf32>
    %64 = vector.shape_cast %63 : vector<1x64x128xf32> to vector<64x128xf32>
    %cst_55 = arith.constant dense<0.000000e+00> : vector<2x128xf32>
    %65 = tpu.matmul %62, %64, %cst_55 {dimension_numbers = #tpu.dot_dimension_numbers<[1], [0], [0], [1], [0, 0, 1, 1], [], []>} : vector<2x64xf32>, vector<64x128xf32>, vector<2x128xf32> -> vector<2x128xf32>
    %c1_56 = arith.constant 1 : index
    %c0_57 = arith.constant 0 : index
    %c0_58 = arith.constant 0 : index
    %66 = vector.load %arg4[%c1_56, %c0_57, %c0_58] : memref<2x1x128xf32, #tpu.memory_space<vmem>>, vector<1x1x128xf32>
    %67 = vector.shape_cast %66 : vector<1x1x128xf32> to vector<1x128xf32>
    %68 = vector.broadcast %67 : vector<1x128xf32> to vector<2x128xf32>
    %69 = arith.addf %65, %68 : vector<2x128xf32>
    %70 = vector.extract_strided_slice %69 {offsets = [0, 0], sizes = [2, 32], strides = [1, 1]} : vector<2x128xf32> to vector<2x32xf32>
    %71 = arith.negf %70 : vector<2x32xf32>
    %72 = math.exp %71 : vector<2x32xf32>
    %cst_59 = arith.constant 1.000000e+00 : f32
    %73 = vector.broadcast %cst_59 : f32 to vector<2x32xf32>
    %74 = arith.addf %73, %72 : vector<2x32xf32>
    %75 = arith.divf %73, %74 : vector<2x32xf32>
    %76 = vector.extract_strided_slice %69 {offsets = [0, 32], sizes = [2, 32], strides = [1, 1]} : vector<2x128xf32> to vector<2x32xf32>
    %77 = arith.negf %76 : vector<2x32xf32>
    %78 = math.exp %77 : vector<2x32xf32>
    %cst_60 = arith.constant 1.000000e+00 : f32
    %79 = vector.broadcast %cst_60 : f32 to vector<2x32xf32>
    %80 = arith.addf %79, %78 : vector<2x32xf32>
    %81 = arith.divf %79, %80 : vector<2x32xf32>
    %82 = vector.extract_strided_slice %69 {offsets = [0, 64], sizes = [2, 32], strides = [1, 1]} : vector<2x128xf32> to vector<2x32xf32>
    %83 = math.tanh %82 : vector<2x32xf32>
    %84 = vector.extract_strided_slice %69 {offsets = [0, 96], sizes = [2, 32], strides = [1, 1]} : vector<2x128xf32> to vector<2x32xf32>
    %85 = arith.negf %84 : vector<2x32xf32>
    %86 = math.exp %85 : vector<2x32xf32>
    %cst_61 = arith.constant 1.000000e+00 : f32
    %87 = vector.broadcast %cst_61 : f32 to vector<2x32xf32>
    %88 = arith.addf %87, %86 : vector<2x32xf32>
    %89 = arith.divf %87, %88 : vector<2x32xf32>
    %90 = arith.mulf %81, %60 : vector<2x32xf32>
    %91 = arith.mulf %75, %83 : vector<2x32xf32>
    %92 = arith.addf %90, %91 : vector<2x32xf32>
    %93 = math.tanh %92 : vector<2x32xf32>
    %94 = arith.mulf %89, %93 : vector<2x32xf32>
    %c1_62 = arith.constant 1 : index
    %c0_63 = arith.constant 0 : index
    %c0_64 = arith.constant 0 : index
    %95 = vector.load %arg8[%c1_62, %c0_63, %c0_64] : memref<2x2x32xf32, #tpu.memory_space<vmem>>, vector<1x2x32xf32>
    %96 = vector.shape_cast %95 : vector<1x2x32xf32> to vector<2x32xf32>
    %97 = vector.shape_cast %94 : vector<2x32xf32> to vector<1x2x32xf32>
    tpu.vector_store %arg8[%c1_62, %c0_63, %c0_64], %97 {strides = array<i32>} : memref<2x2x32xf32, #tpu.memory_space<vmem>>, vector<1x2x32xf32>,
    %c1_65 = arith.constant 1 : index
    %c0_66 = arith.constant 0 : index
    %c0_67 = arith.constant 0 : index
    %98 = vector.load %arg9[%c1_65, %c0_66, %c0_67] : memref<2x2x32xf32, #tpu.memory_space<vmem>>, vector<1x2x32xf32>
    %99 = vector.shape_cast %98 : vector<1x2x32xf32> to vector<2x32xf32>
    %100 = vector.shape_cast %92 : vector<2x32xf32> to vector<1x2x32xf32>
    tpu.vector_store %arg9[%c1_65, %c0_66, %c0_67], %100 {strides = array<i32>} : memref<2x2x32xf32, #tpu.memory_space<vmem>>, vector<1x2x32xf32>,
    %c0_68 = arith.constant 0 : index
    %c32_69 = arith.constant 32 : index
    %101 = vector.load %arg11[%c0_68, %c32_69] : memref<2x64xf32, #tpu.memory_space<vmem>>, vector<2x32xf32>
    tpu.vector_store %arg11[%c0_68, %c32_69], %94 {strides = array<i32>} : memref<2x64xf32, #tpu.memory_space<vmem>>, vector<2x32xf32>,
    %c0_70 = arith.constant 0 : index
    %c0_71 = arith.constant 0 : index
    %102 = vector.load %arg11[%c0_70, %c0_71] : memref<2x64xf32, #tpu.memory_space<vmem>>, vector<2x64xf32>
    %c0_72 = arith.constant 0 : index
    %c0_73 = arith.constant 0 : index
    %103 = vector.load %arg5[%c0_72, %c0_73] : memref<64x8xf32, #tpu.memory_space<vmem>>, vector<64x8xf32>
    %cst_74 = arith.constant dense<0.000000e+00> : vector<2x8xf32>
    %104 = tpu.matmul %102, %103, %cst_74 {dimension_numbers = #tpu.dot_dimension_numbers<[1], [0], [0], [1], [0, 0, 1, 1], [], []>} : vector<2x64xf32>, vector<64x8xf32>, vector<2x8xf32> -> vector<2x8xf32>
    %c0_75 = arith.constant 0 : index
    %c0_76 = arith.constant 0 : index
    %105 = vector.load %arg6[%c0_75, %c0_76] : memref<1x8xf32, #tpu.memory_space<vmem>>, vector<1x8xf32>
    %106 = vector.broadcast %105 : vector<1x8xf32> to vector<2x8xf32>
    %107 = arith.addf %104, %106 : vector<2x8xf32>
    %cst_77 = arith.constant 2.000000e+01 : f32
    %108 = vector.broadcast %cst_77 : f32 to vector<2x8xf32>
    %109 = arith.cmpf ogt, %107, %108 : vector<2x8xf32>
    %cst_78 = arith.constant 2.000000e+01 : f32
    %110 = vector.broadcast %cst_78 : f32 to vector<2x8xf32>
    %111 = arith.minimumf %107, %110 : vector<2x8xf32>
    %112 = math.exp %111 : vector<2x8xf32>
    %113 = math.log1p %112 : vector<2x8xf32>
    %114 = arith.select %109, %107, %113 : vector<2x8xi1>, vector<2x8xf32>
    %115 = arith.select %6, %107, %114 : vector<2x8xi1>, vector<2x8xf32>
    %116 = arith.index_cast %c0_i32 : i32 to index
    %c0_79 = arith.constant 0 : index
    %c0_80 = arith.constant 0 : index
    %117 = vector.load %arg7[%116, %c0_79, %c0_80] : memref<1x2x8xf32, #tpu.memory_space<vmem>>, vector<1x2x8xf32>
    %118 = vector.shape_cast %117 : vector<1x2x8xf32> to vector<2x8xf32>
    %119 = vector.shape_cast %115 : vector<2x8xf32> to vector<1x2x8xf32>
    tpu.vector_store %arg7[%116, %c0_79, %c0_80], %119 {strides = array<i32>} : memref<1x2x8xf32, #tpu.memory_space<vmem>>, vector<1x2x8xf32>,
    %c1_i32 = arith.constant 1 : i32
    return
  }
}

</mosaic_0001>

<llo_original>
// kernel: tpu_custom_call.1
$region0: #{tpu_custom_call.1}
  #allocation0 [shape = 'u32[]', space=smem, size = 0x4, offset = 0x4, fixed_abs, tag = 'smem constant byte address 0x4 - core index']
  #allocation1 [shape = 'u32[72,128]{1,0:T(1,128)}', space=vmem, size = 0x9000, scoped, tag = 'internal scratch']
  #allocation2 [shape = 'f32[2,64]{1,0:T(2,128)}', space=vmem, size = 0x400, scoped, tag = 'scratch operand']
  #allocation3 [shape = 'f32[2,64]{1,0:T(2,128)}', space=vmem, size = 0x400, scoped, tag = 'scratch operand']
  %s0 = inlined_call_operand.vmem [shape: f32[1,2,32], index: 0, kind: input, shape index: {}]
  %s1 = inlined_call_operand.vmem [shape: f32[2,2,32], index: 1, kind: input, shape index: {}]
  %s2 = inlined_call_operand.vmem [shape: f32[2,2,32], index: 2, kind: input, shape index: {}]
  %s3 = inlined_call_operand.hbm [shape: f32[2,64,128], index: 3, kind: input, shape index: {}]
  %s4 = inlined_call_operand.vmem [shape: f32[2,1,128], index: 4, kind: input, shape index: {}]
  %s5 = inlined_call_operand.vmem [shape: f32[64,8], index: 5, kind: input, shape index: {}]
  %s6 = inlined_call_operand.vmem [shape: f32[1,8], index: 6, kind: input, shape index: {}]
  %s7 = inlined_call_operand.hbm [shape: f32[1,2,8], index: 7, kind: output, shape index: {0}]
  %s8 = inlined_call_operand.hbm [shape: f32[2,2,32], index: 8, kind: output, shape index: {1}]
  %s9 = inlined_call_operand.hbm [shape: f32[2,2,32], index: 9, kind: output, shape index: {2}]
  %10 = xla_tuple %s7, %s8, %s9
  %s11 = sld [smem:[#allocation0]]
  $region58: #{tpu_custom_call.1} parent=0
    _
  %s13 = ssub.s32 1, %s11
  %s14 = scalar_select 0, %s13, %s11
  $region1: #{tpu_custom_call.1} parent=0
    #allocation4 [shape = 'u8[65536]{0}', space=vmem, size = 0x10000, scoped, tag = 'input window, operand 3, single buffered']
    #allocation5 [shape = 's32[1]{0}', space=sflag, size = 0x4, scoped, tag = 'scoped memory for tpu_custom_call.1']
    #allocation6 [shape = 's32[1]{0}', space=sflag, size = 0x4, scoped, tag = 'scoped memory for tpu_custom_call.1']
    #allocation7 [shape = 'u8[1024]{0}', space=vmem, size = 0x400, scoped, tag = 'output window, operand 0, single buffered']
    #allocation8 [shape = 'u8[2048]{0}', space=vmem, size = 0x800, scoped, tag = 'output window, operand 1, single buffered']
    #allocation9 [shape = 's32[1]{0}', space=sflag, size = 0x4, scoped, tag = 'scoped memory for tpu_custom_call.1']
    #allocation10 [shape = 'u8[2048]{0}', space=vmem, size = 0x800, scoped, tag = 'output window, operand 2, single buffered']
    %15 = vsyncpa [#allocation5], 0
    %16 = vsyncpa [#allocation6], 0
    %17 = vsyncpa [#allocation9], 0
    // Predicated region
    $region2: #{tpu_custom_call.1} parent=1 // pred_check
      _
    $region3: #{tpu_custom_call.1} parent=1 // pred_check_branch
      %19 = sbr.rel (0) target = $region5
    $region4: #{tpu_custom_call.1} parent=1 // pred_region
      _
    $region5: #{tpu_custom_call.1} parent=1 // pred_fallthru
      _
    // Predicated region
    $region6: #{tpu_custom_call.1} parent=1 // pred_check
      _
    $region7: #{tpu_custom_call.1} parent=1 // pred_check_branch
      %21 = sbr.rel (0) target = $region9
    $region8: #{tpu_custom_call.1} parent=1 // pred_region
      _
    $region9: #{tpu_custom_call.1} parent=1 // pred_fallthru
      _
    // Predicated region
    $region10: #{tpu_custom_call.1} parent=1 // pred_check
      _
    $region11: #{tpu_custom_call.1} parent=1 // pred_check_branch
      %23 = sbr.rel (0) target = $region13
    $region12: #{tpu_custom_call.1} parent=1 // pred_region
      _
    $region13: #{tpu_custom_call.1} parent=1 // pred_fallthru
      _
    // Predicated region
    $region14: #{tpu_custom_call.1} parent=1 // pred_check
      _
    $region15: #{tpu_custom_call.1} parent=1 // pred_check_branch
      %25 = sbr.rel (0) target = $region17
    $region16: #{tpu_custom_call.1} parent=1 // pred_region
      %27 = vsyncadd [#allocation5], 0
      %s28 = sshll.u32 %s3, 4
      %s29 = int_to_ptr.hbm [resolvable:$true] %s28
      %s30 = sshll.u32 [#allocation4], 4
      %s31 = int_to_ptr.vmem [resolvable:$true] %s30
      %36 = dma.hbm_to_vmem [thread:$0]  %s29, 2048, %s31, [#allocation5], 128, 128, 8
    $region17: #{tpu_custom_call.1} parent=1 // pred_fallthru
      _
    // Predicated region
    $region18: #{tpu_custom_call.1} parent=1 // pred_check
      _
    $region19: #{tpu_custom_call.1} parent=1 // pred_check_branch
      %38 = sbr.rel (0) target = $region21
    $region20: #{tpu_custom_call.1} parent=1 // pred_region
      _
    $region21: #{tpu_custom_call.1} parent=1 // pred_fallthru
      _
    // Predicated region
    $region22: #{tpu_custom_call.1} parent=1 // pred_check
      _
    $region23: #{tpu_custom_call.1} parent=1 // pred_check_branch
      %40 = sbr.rel (0) target = $region25
    $region24: #{tpu_custom_call.1} parent=1 // pred_region
      _
    $region25: #{tpu_custom_call.1} parent=1 // pred_fallthru
      _
    // Predicated region
    $region26: #{tpu_custom_call.1} parent=1 // pred_check
      _
    $region27: #{tpu_custom_call.1} parent=1 // pred_check_branch
      %42 = sbr.rel (0) target = $region29
    $region28: #{tpu_custom_call.1} parent=1 // pred_region
      _
    $region29: #{tpu_custom_call.1} parent=1 // pred_fallthru
      _
    // Predicated region
    $region30: #{tpu_custom_call.1} parent=1 // pred_check
      _
    $region31: #{tpu_custom_call.1} parent=1 // pred_check_branch
      %44 = sbr.rel (0) target = $region33
    $region32: #{tpu_custom_call.1} parent=1 // pred_region
      %46 = dma.done [#allocation5], 2048
    $region33: #{tpu_custom_call.1} parent=1 // pred_fallthru
      _
    %v47 = vld [vmem:[%s1] sm:$0x3]
    %v48 = vld [vmem:[%s1 + $0x2] sm:$0x3]
    %vm49 = vcmask 254976
    %50 = vst.msk [vmem:[#allocation8] sm:$0x3] %vm49, %v47
    %51 = vst.msk [vmem:[#allocation8 + $0x2] sm:$0x3] %vm49, %v48
    %v52 = vld [vmem:[%s2] sm:$0x3]
    %v53 = vld [vmem:[%s2 + $0x2] sm:$0x3]
    %54 = vst.msk [vmem:[#allocation10] sm:$0x3] %vm49, %v52
    %55 = vst.msk [vmem:[#allocation10 + $0x2] sm:$0x3] %vm49, %v53
    %v56 = vlaneseq
    %v57 = vand.u32 %v56, 127
    %vm58 = vcmp.lt.s32.totalorder %v57, 4
    %v59 = vld [vmem:[%s0] sm:$0x3]
    %60 = vst.msk [vmem:[#allocation2] sm:$0x3] %vm49, %v59
    %v61 = vld [vmem:[#allocation8] sm:$0x3]
    %v62 = vld [vmem:[#allocation10] sm:$0x3]
    %64 = vrot.lane.b32.xlu0 %v61, 32
    %v65 = vpop.permute.xlu0 %64
    %vm67 = vcmask 517376
    %68 = vst.msk [vmem:[#allocation2] sm:$0x3] %vm67, %v65
    %v69 = vld [vmem:[#allocation2] sm:$0x3]
    %v70 = vld [vmem:[#allocation4] sm:$0xff]
    %v71 = vld [vmem:[#allocation4 + $0x8] sm:$0xff]
    %v72 = vld [vmem:[#allocation4 + $0x10] sm:$0xff]
    %v73 = vld [vmem:[#allocation4 + $0x18] sm:$0xff]
    %v74 = vld [vmem:[#allocation4 + $0x20] sm:$0xff]
    %v75 = vld [vmem:[#allocation4 + $0x28] sm:$0xff]
    %v76 = vld [vmem:[#allocation4 + $0x30] sm:$0xff]
    %v77 = vld [vmem:[#allocation4 + $0x38] sm:$0xff]
    %v78 = vld [vmem:[%s4] sm:$0x1]
    %v80 = vperm.slane %v78, 0
    %vm82 = vcmask 523264
    %v84 = vsel %vm82, %v69, 0
    %86 = vmatpush.msra.mxu0 0.0
    %87 = vmatpush.msra.mxu0 0.0
    %88 = vmatpush.msra.mxu0 0.0
    %89 = vmatpush.msra.mxu0 0.0
    %90 = vmatpush.msra.mxu0 0.0
    %91 = vmatpush.msra.mxu0 0.0
    %92 = vmatpush.msra.mxu0 0.0
    %93 = vmatpush.msra.mxu0 0.0
    %94 = vmatpush.msra.mxu0 %v77
    %95 = vmatpush.msra.mxu0 %v76
    %96 = vmatpush.msra.mxu0 %v75
    %97 = vmatpush.msra.mxu0 %v74
    %98 = vmatpush.msra.mxu0 %v73
    %99 = vmatpush.msra.mxu0 %v72
    %100 = vmatpush.msra.mxu0 %v71
    %101 = vmatpush.msra.mxu0 %v70
    %102 = vmatmul.f32.gmra.mxu0 %v84
    %v103 = vpop.f32.mrf.mxu0
    %v104 = vadd.f32 %v80, %v103
    %105 = vdwg.mxu0
    %v106 = vxor.u32 %v104, 2147483648
    %v107 = vmul.f32 %v106, 1.442695
    %v108 = vpow.pop %v107
    %v109 = vadd.f32 %v108, 1.0
    %v110 = vrcp.pop %v109
    %v111 = vmul.f32 %v109, %v110
    %v112 = vsub.f32 1.0, %v111
    %v113 = vmul.f32 %v110, %v112
    %v114 = vadd.f32 %v110, %v113
    %vm115 = vweird.f32 %v109
    %vm116 = vweird.f32 %v110
    %vm117 = vmor %vm115, %vm116
    %v118 = vsel %vm117, %v110, %v114
    %v119 = vand.u32 2147483647, %v109
    %vm120 = vcmp.eq.f32.partialorder %v119, 8.507059e+37
    %v121 = vand.u32 %v109, 2147483648
    %v122 = vor.u32 1.1754944e-38, %v121
    %v123 = vsel %vm120, %v122, %v118
    %v124 = vmul.f32 1.0, %v123
    %v125 = vtanh.pop %v104
    %127 = vrot.lane.b32.xlu0 %v62, 32
    %v128 = vpop.permute.xlu0 %127
    %v130 = vmul.f32 %v124, %v128
    %132 = vrot.lane.b32.xlu0 %v125, 64
    %v133 = vpop.permute.xlu0 %132
    %v135 = vmul.f32 %v124, %v133
    %137 = vrot.lane.b32.xlu0 %v135, 32
    %v138 = vpop.permute.xlu0 %137
    %v140 = vadd.f32 %v130, %v138
    %v141 = vtanh.pop %v140
    %143 = vrot.lane.b32.xlu0 %v141, 64
    %v144 = vpop.permute.xlu0 %143
    %v146 = vmul.f32 %v124, %v144
    %148 = vrot.lane.b32.xlu0 %v146, 32
    %v149 = vpop.permute.xlu0 %148
    %151 = vst.msk [vmem:[#allocation8] sm:$0x3] %vm49, %v149
    %153 = vrot.lane.b32.xlu0 %v140, 96
    %v154 = vpop.permute.xlu0 %153
    %156 = vst.msk [vmem:[#allocation10] sm:$0x3] %vm49, %v154
    %157 = vst.msk [vmem:[#allocation3] sm:$0x3] %vm49, %v149
    %158 = vst.msk [vmem:[#allocation2] sm:$0x3] %vm49, %v149
    %s159 = scalar_lea.vmem [#allocation8], 2
    %v160 = vld [vmem:[%s159] sm:$0x3]
    %s161 = scalar_lea.vmem [#allocation10], 2
    %v162 = vld [vmem:[%s161] sm:$0x3]
    %164 = vrot.lane.b32.xlu0 %v160, 32
    %v165 = vpop.permute.xlu0 %164
    %167 = vst.msk [vmem:[#allocation2] sm:$0x3] %vm67, %v165
    %v168 = vld [vmem:[#allocation2] sm:$0x3]
    %s169 = scalar_lea.vmem [#allocation4], 64
    %v170 = vld [vmem:[%s169] sm:$0xff]
    %v171 = vld [vmem:[%s169 + $0x8] sm:$0xff]
    %v172 = vld [vmem:[%s169 + $0x10] sm:$0xff]
    %v173 = vld [vmem:[%s169 + $0x18] sm:$0xff]
    %v174 = vld [vmem:[%s169 + $0x20] sm:$0xff]
    %v175 = vld [vmem:[%s169 + $0x28] sm:$0xff]
    %v176 = vld [vmem:[%s169 + $0x30] sm:$0xff]
    %v177 = vld [vmem:[%s169 + $0x38] sm:$0xff]
    %s178 = scalar_lea.vmem %s4, 1
    %v179 = vld [vmem:[%s178] sm:$0x1]
    %v181 = vperm.slane %v179, 0
    %v184 = vsel %vm82, %v168, 0
    %186 = vmatpush.msra.mxu0 0.0
    %187 = vmatpush.msra.mxu0 0.0
    %188 = vmatpush.msra.mxu0 0.0
    %189 = vmatpush.msra.mxu0 0.0
    %190 = vmatpush.msra.mxu0 0.0
    %191 = vmatpush.msra.mxu0 0.0
    %192 = vmatpush.msra.mxu0 0.0
    %193 = vmatpush.msra.mxu0 0.0
    %194 = vmatpush.msra.mxu0 %v177
    %195 = vmatpush.msra.mxu0 %v176
    %196 = vmatpush.msra.mxu0 %v175
    %197 = vmatpush.msra.mxu0 %v174
    %198 = vmatpush.msra.mxu0 %v173
    %199 = vmatpush.msra.mxu0 %v172
    %200 = vmatpush.msra.mxu0 %v171
    %201 = vmatpush.msra.mxu0 %v170
    %202 = vmatmul.f32.gmra.mxu0 %v184
    %v203 = vpop.f32.mrf.mxu0
    %v204 = vadd.f32 %v181, %v203
    %205 = vdwg.mxu0
    %v206 = vxor.u32 %v204, 2147483648
    %v207 = vmul.f32 %v206, 1.442695
    %v208 = vpow.pop %v207
    %v209 = vadd.f32 %v208, 1.0
    %v210 = vrcp.pop %v209
    %v211 = vmul.f32 %v209, %v210
    %v212 = vsub.f32 1.0, %v211
    %v213 = vmul.f32 %v210, %v212
    %v214 = vadd.f32 %v210, %v213
    %vm215 = vweird.f32 %v209
    %vm216 = vweird.f32 %v210
    %vm217 = vmor %vm215, %vm216
    %v218 = vsel %vm217, %v210, %v214
    %v219 = vand.u32 2147483647, %v209
    %vm220 = vcmp.eq.f32.partialorder %v219, 8.507059e+37
    %v221 = vand.u32 %v209, 2147483648
    %v222 = vor.u32 1.1754944e-38, %v221
    %v223 = vsel %vm220, %v222, %v218
    %v224 = vmul.f32 1.0, %v223
    %v225 = vtanh.pop %v204
    %227 = vrot.lane.b32.xlu0 %v162, 32
    %v228 = vpop.permute.xlu0 %227
    %v230 = vmul.f32 %v224, %v228
    %232 = vrot.lane.b32.xlu0 %v225, 64
    %v233 = vpop.permute.xlu0 %232
    %v235 = vmul.f32 %v224, %v233
    %237 = vrot.lane.b32.xlu0 %v235, 32
    %v238 = vpop.permute.xlu0 %237
    %v240 = vadd.f32 %v230, %v238
    %v241 = vtanh.pop %v240
    %243 = vrot.lane.b32.xlu0 %v241, 64
    %v244 = vpop.permute.xlu0 %243
    %v246 = vmul.f32 %v224, %v244
    %248 = vrot.lane.b32.xlu0 %v246, 32
    %v249 = vpop.permute.xlu0 %248
    %251 = vst.msk [vmem:[%s159] sm:$0x3] %vm49, %v249
    %253 = vrot.lane.b32.xlu0 %v240, 96
    %v254 = vpop.permute.xlu0 %253
    %256 = vst.msk [vmem:[%s161] sm:$0x3] %vm49, %v254
    %257 = vrot.lane.b32.xlu0 %v246, 64
    %v258 = vpop.permute.xlu0 %257
    %260 = vst.msk [vmem:[#allocation3] sm:$0x3] %vm67, %v258
    %v261 = vld [vmem:[#allocation3] sm:$0x3]
    %v262 = vld [vmem:[%s5] sm:$0xff]
    %v263 = vld [vmem:[%s5 + $0x8] sm:$0xff]
    %v264 = vld [vmem:[%s5 + $0x10] sm:$0xff]
    %v265 = vld [vmem:[%s5 + $0x18] sm:$0xff]
    %v266 = vld [vmem:[%s5 + $0x20] sm:$0xff]
    %v267 = vld [vmem:[%s5 + $0x28] sm:$0xff]
    %v268 = vld [vmem:[%s5 + $0x30] sm:$0xff]
    %v269 = vld [vmem:[%s5 + $0x38] sm:$0xff]
    %v270 = vld [vmem:[%s6] sm:$0x1]
    %v272 = vperm.slane %v270, 0
    %v275 = vsel %vm82, %v261, 0
    %277 = vmatpush.msra.mxu0 0.0
    %278 = vmatpush.msra.mxu0 0.0
    %279 = vmatpush.msra.mxu0 0.0
    %280 = vmatpush.msra.mxu0 0.0
    %281 = vmatpush.msra.mxu0 0.0
    %282 = vmatpush.msra.mxu0 0.0
    %283 = vmatpush.msra.mxu0 0.0
    %284 = vmatpush.msra.mxu0 0.0
    %285 = vmatpush.msra.mxu0 %v269
    %286 = vmatpush.msra.mxu0 %v268
    %287 = vmatpush.msra.mxu0 %v267
    %288 = vmatpush.msra.mxu0 %v266
    %289 = vmatpush.msra.mxu0 %v265
    %290 = vmatpush.msra.mxu0 %v264
    %291 = vmatpush.msra.mxu0 %v263
    %292 = vmatpush.msra.mxu0 %v262
    %293 = vmatmul.f32.gmra.mxu0 %v275
    %v294 = vpop.f32.mrf.mxu0
    %v295 = vadd.f32 %v272, %v294
    %296 = vdwg.mxu0
    %vm297 = vcmp.gt.f32.partialorder %v295, 20.0
    %v298 = vmin.f32 %v295, 20.0
    %v299 = vmul.f32 %v298, 1.442695
    %v300 = vpow.pop %v299
    %v301 = vadd.f32 %v300, 1.0
    %v302 = vlog2.pop %v301
    %v303 = vmul.f32 %v302, 0.6931472
    %v304 = vmul.f32 -0.5, %v300
    %v305 = vadd.f32 %v304, 1.0
    %v306 = vmul.f32 %v305, %v300
    %v307 = vand.u32 2147483647, %v300
    %vm308 = vcmp.lt.f32.partialorder %v307, 0.0004427343
    %v309 = vsel %vm308, %v306, %v303
    %v310 = vsel %vm297, %v295, %v309
    %v311 = vsel %vm58, %v295, %v310
    %vm312 = vcmask 58368
    %313 = vst.msk [vmem:[#allocation7] sm:$0x3] %vm312, %v311
    // Predicated region
    $region34: #{tpu_custom_call.1} parent=1 // pred_check
      _
    $region35: #{tpu_custom_call.1} parent=1 // pred_check_branch
      %315 = sbr.rel (0) target = $region37
    $region36: #{tpu_custom_call.1} parent=1 // pred_region
      %317 = vsyncadd [#allocation6], 0
      %s319 = sshll.u32 [#allocation7], 4
      %s320 = int_to_ptr.vmem [resolvable:$true] %s319
      %s321 = sshll.u32 %s7, 4
      %s322 = int_to_ptr.hbm [resolvable:$true] %s321
      %324 = dma.vmem_to_hbm [thread:$0]  %s320, 32, %s322, [#allocation6]
    $region37: #{tpu_custom_call.1} parent=1 // pred_fallthru
      _
    // Predicated region
    $region38: #{tpu_custom_call.1} parent=1 // pred_check
      _
    $region39: #{tpu_custom_call.1} parent=1 // pred_check_branch
      %326 = sbr.rel (0) target = $region41
    $region40: #{tpu_custom_call.1} parent=1 // pred_region
      %328 = vsyncadd [#allocation9], 0
      %s329 = sshll.u32 [#allocation8], 4
      %s330 = int_to_ptr.vmem [resolvable:$true] %s329
      %s331 = sshll.u32 %s8, 4
      %s332 = int_to_ptr.hbm [resolvable:$true] %s331
      %337 = dma.vmem_to_hbm [thread:$0]  %s330, 64, %s332, [#allocation9], 32, 32, 2
    $region41: #{tpu_custom_call.1} parent=1 // pred_fallthru
      _
    // Predicated region
    $region42: #{tpu_custom_call.1} parent=1 // pred_check
      _
    $region43: #{tpu_custom_call.1} parent=1 // pred_check_branch
      %339 = sbr.rel (0) target = $region45
    $region44: #{tpu_custom_call.1} parent=1 // pred_region
      %341 = vsyncadd [#allocation9], 0
      %s342 = sshll.u32 [#allocation10], 4
      %s343 = int_to_ptr.vmem [resolvable:$true] %s342
      %s344 = sshll.u32 %s9, 4
      %s345 = int_to_ptr.hbm [resolvable:$true] %s344
      %350 = dma.vmem_to_hbm [thread:$0]  %s343, 64, %s345, [#allocation9], 32, 32, 2
    $region45: #{tpu_custom_call.1} parent=1 // pred_fallthru
      _
    // Predicated region
    $region46: #{tpu_custom_call.1} parent=1 // pred_check
      _
    $region47: #{tpu_custom_call.1} parent=1 // pred_check_branch
      %352 = sbr.rel (0) target = $region49
    $region48: #{tpu_custom_call.1} parent=1 // pred_region
      %354 = dma.done [#allocation6], 32
    $region49: #{tpu_custom_call.1} parent=1 // pred_fallthru
      _
    // Predicated region
    $region50: #{tpu_custom_call.1} parent=1 // pred_check
      _
    $region51: #{tpu_custom_call.1} parent=1 // pred_check_branch
      %356 = sbr.rel (0) target = $region53
    $region52: #{tpu_custom_call.1} parent=1 // pred_region
      %358 = dma.done [#allocation9], 64
    $region53: #{tpu_custom_call.1} parent=1 // pred_fallthru
      _
    // Predicated region
    $region54: #{tpu_custom_call.1} parent=1 // pred_check
      _
    $region55: #{tpu_custom_call.1} parent=1 // pred_check_branch
      %360 = sbr.rel (0) target = $region57
    $region56: #{tpu_custom_call.1} parent=1 // pred_region
      %362 = dma.done [#allocation9], 64
    $region57: #{tpu_custom_call.1} parent=1 // pred_fallthru
      _
    %363 = vsyncpa [#allocation5], 1
    %364 = vsyncpa [#allocation6], 1
    %365 = vsyncpa [#allocation9], 1

</llo_original>
